<compile_context>
chip_gen: v5e
topology: v5e:2x2
jax: 0.10.0
libtpu: 0.0.40
codegen_flags: <defaults>
</compile_context>

<pallas_src>
import numpy as np
import jax
import jax.numpy as jnp
from jax.experimental import pallas as pl
from jax.experimental.pallas import tpu as pltpu


# 1-D stencils, identical to GradOperators.diff_kernel:
#   d[i] = k0 * x[i-1] + k1 * x[i] + k2 * x[i+1]   (circular indexing)
_KERNS = {
    "doublecentral": (-1.0, 0.0, 1.0),
    "central": (-0.5, 0.0, 0.5),
    "forward": (0.0, -1.0, 1.0),
    "backward": (-1.0, 1.0, 0.0),
}


def _apply_stencil(k0, k1, k2, xm1_fn, x, xp1_fn):
    """k0*x[i-1] + k1*x[i] + k2*x[i+1] with minimal VPU ops.

    Neighbour values are produced lazily (thunks) so zero-coefficient taps never
    emit a roll.  Positive-coefficient terms are accumulated first so a -1
    coefficient lowers to a single subtract instead of negate+add.
    """
    terms = ((k0, xm1_fn), (k1, lambda: x), (k2, xp1_fn))
    acc = None
    for c, fn in terms:
        if c > 0.0:
            v = fn()
            if c != 1.0:
                v = c * v
            acc = v if acc is None else acc + v
    for c, fn in terms:
        if c < 0.0:
            v = fn()
            if c != -1.0:
                v = (-c) * v
            acc = (-v) if acc is None else acc - v
    return acc if acc is not None else jnp.zeros_like(x)


def _roll_axis(x, shift, axis, size):
    """Circular roll (jnp.roll semantics) via the XLU; no-op when shift%size==0."""
    s = shift % size
    if s == 0:
        return x
    return pltpu.roll(x, s, axis=axis)


def _make_grad3d_body(H, W, k0, k1, k2, compute_dtype):
    """Fast path: block (tb, H, W) with H%8==0 and W%128==0.

    Circular wrap is handled natively by rolling along a full logical axis, so
    there is no iota / mod / select, and both channel stores are lane-aligned.
    """
    def body(x_ref, o_ref):
        x = x_ref[...].astype(compute_dtype)                       # (tb, H, W)
        dh = _apply_stencil(k0, k1, k2,
                            lambda: _roll_axis(x, 1, 1, H), x,
                            lambda: _roll_axis(x, -1, 1, H))
        o_ref[:, 0, :, :] = dh.astype(o_ref.dtype)                 # store early
        dw = _apply_stencil(k0, k1, k2,
                            lambda: _roll_axis(x, 1, 2, W), x,
                            lambda: _roll_axis(x, -1, 2, W))
        o_ref[:, 1, :, :] = dw.astype(o_ref.dtype)
    return body


def _make_flat_body(H, W, k0, k1, k2, compute_dtype):
    """Fallback path: lane-dense flattened rows (tb, H*W)."""
    HW = H * W

    def roll_flat(x, shift):
        return _roll_axis(x, shift, 1, HW)

    def body(x_ref, o_ref):
        x = x_ref[...].astype(compute_dtype)                       # (tb, HW)

        # ---- d/dH: neighbours sit +-W away in the flattened row; a circular
        # wrap of the flat index is exactly a circular wrap in H.
        dh = _apply_stencil(k0, k1, k2,
                            lambda: roll_flat(x, W), x,
                            lambda: roll_flat(x, -W))
        # Store d/dH before building the d/dW temporaries (shorter live ranges).
        o_ref[:, 0:HW] = dh.astype(o_ref.dtype)

        # ---- d/dW: lane roll by +-1 plus a fix-up on the wrap column of each
        # W-group.  The column mask is built once on a (1, HW) row and
        # broadcast by jnp.where (cuts the int-mod/compare work by tb x).
        col = jax.lax.broadcasted_iota(jnp.int32, (1, HW), 1) % W

        def left():   # x[h, w-1]
            return jnp.where(col == 0, roll_flat(x, -(W - 1)), roll_flat(x, 1))

        def right():  # x[h, w+1]
            return jnp.where(col == W - 1, roll_flat(x, W - 1), roll_flat(x, -1))

        dw = _apply_stencil(k0, k1, k2, left, x, right)
        o_ref[:, HW:2 * HW] = dw.astype(o_ref.dtype)
    return body


def _multi_component_kernel(pair_body, n_comp):
    """Apply the same (x_ref -> o_ref) body to n_comp input/output pairs."""
    def kernel(*refs):
        ins, outs = refs[:n_comp], refs[n_comp:]
        for x_ref, o_ref in zip(ins, outs):
            pair_body(x_ref, o_ref)
    return kernel


def _kernel_compute_dtype(dtype):
    """bf16 math on chips with a bf16 VPU (v6e/v7x); f32 upcast everywhere else."""
    if dtype == jnp.bfloat16:
        try:
            kind = jax.devices()[0].device_kind.lower()
        except Exception:
            kind = ""
        if ("v6" in kind) or ("v7" in kind):
            return jnp.bfloat16
    return jnp.float32


def _pick_block_batch(n, row_elems, itemsize, n_comp, upcast):
    """Images (rows) per grid step.

    Dtype-aware: ~4 MiB of native bytes per input tile per component when the
    in-kernel math stays in the native dtype, ~2 MiB when it upcasts to f32
    (f32 temporaries double VMEM pressure).  Rounded to the dtype's full
    sublane packing (8/f32, 16/bf16, 32/int8).  When a single block would cover
    the whole batch but n allows an aligned split, force >=2 grid steps so
    dimension_semantics=('parallel',) can shard across v7x's two TensorCores.
    """
    sub = max(8, 32 // itemsize)
    target = (4 if not upcast else 2) * 1024 * 1024 // max(1, n_comp)
    tb = max(1, target // (row_elems * itemsize))
    if tb >= n:
        if n >= 2 * sub:
            half = -(-n // 2)                       # ceil(n/2)
            return int(-(-half // sub) * sub)       # round up to sublane multiple (< n)
        return int(n)
    if tb >= sub:
        return int((tb // sub) * sub)
    # Very large single images (multi-MiB rows): one packed sublane group per
    # step; the VMEM limit below is raised accordingly.
    # TODO(synk): spatial (H) tiling with a +-1-row halo for huge single images.
    return int(sub if n >= sub else n)


def apply_G(x, mode="doublecentral"):
    """Pallas implementation of GradOperators(dim=2, mode, padmode='circular').apply_G."""
    if mode not in _KERNS:
        raise ValueError(
            f"mode should be one of (central, forward, backward, doublecentral), not {mode}")
    k0, k1, k2 = _KERNS[mode]

    if jnp.iscomplexobj(x):
        # Two separate components through ONE pallas_call (no stacked copy in HBM).
        comps = (jnp.real(x), jnp.imag(x))
    else:
        if not jnp.issubdtype(x.dtype, jnp.floating):
            x = x.astype(jnp.float32)       # ints -> f32 (torch conv needs float too)
        comps = (x,)
    n_comp = len(comps)

    x0 = comps[0]
    dtype = x0.dtype
    lead = x0.shape[:-2]
    H, W = int(x0.shape[-2]), int(x0.shape[-1])
    HW = H * W
    n = int(np.prod(lead)) if lead else 1

    compute_dtype = _kernel_compute_dtype(dtype)
    itemsize = np.dtype(dtype).itemsize
    comp_itemsize = np.dtype(compute_dtype).itemsize
    upcast = comp_itemsize > itemsize
    tb = _pick_block_batch(n, HW, itemsize, n_comp, upcast)
    grid = (pl.cdiv(n, tb),)

    fast3d = (H % 8 == 0) and (W % 128 == 0)
    if fast3d:
        ins = tuple(c.reshape(n, H, W) for c in comps)
        in_spec = pl.BlockSpec((tb, H, W), lambda i: (i, 0, 0))
        out_spec = pl.BlockSpec((tb, 2, H, W), lambda i: (i, 0, 0, 0))
        out_shape = jax.ShapeDtypeStruct((n, 2, H, W), dtype)
        body = _make_grad3d_body(H, W, k0, k1, k2, compute_dtype)
    else:
        ins = tuple(c.reshape(n, HW) for c in comps)
        in_spec = pl.BlockSpec((tb, HW), lambda i: (i, 0))
        out_spec = pl.BlockSpec((tb, 2 * HW), lambda i: (i, 0))
        out_shape = jax.ShapeDtypeStruct((n, 2 * HW), dtype)
        body = _make_flat_body(H, W, k0, k1, k2, compute_dtype)

    kernel = _multi_component_kernel(body, n_comp)

    # VMEM budget: double-buffered input+output blocks plus in-kernel temporaries
    # (rough upper bound).  Floor of 48 MiB, capped well under v5e/v6e physical;
    # for normal tiles the need is far below the floor (v7x-safe at 64 MiB).
    in_blk = tb * HW * itemsize
    out_blk = 2 * in_blk
    tmp_blk = 8 * tb * HW * comp_itemsize
    need = n_comp * (2 * (in_blk + out_blk) + tmp_blk) + (4 << 20)
    vmem_limit = int(min(max(need, 48 << 20), 100 << 20))

    ys = pl.pallas_call(
        kernel,
        out_shape=tuple(out_shape for _ in range(n_comp)),
        grid=grid,
        in_specs=[in_spec] * n_comp,
        out_specs=tuple(out_spec for _ in range(n_comp)),
        compiler_params=pltpu.CompilerParams(
            dimension_semantics=("parallel",),      # megacore-shardable batch axis
            vmem_limit_bytes=vmem_limit,
        ),
    )(*ins)

    # (n, ...) -> (*lead, 2, H, W): both layouts are contiguous, reshape is free.
    ys = [y.reshape(*lead, 2, H, W) for y in ys]
    if n_comp == 2:
        return jax.lax.complex(ys[0], ys[1])
    return ys[0]


def grad_operators_forward(x, direction=1, mode="doublecentral"):
    """Matches GradOperators(dim=2, mode, padmode='circular').forward."""
    if direction <= 0:
        # TODO(synk): adjoint apply_GH / normal op apply_GHG (direction<=0) not implemented.
        raise NotImplementedError("Only direction > 0 (apply_G) is implemented in Pallas.")
    return apply_G(x, mode)


if __name__ == "__main__":
    key = jax.random.PRNGKey(0)
    x = jax.random.normal(key, (2, 4, 16, 16), dtype=jnp.float32)

    def ref_grad(xx):
        rh = jnp.roll(xx, -1, axis=-2) - jnp.roll(xx, 1, axis=-2)
        rw = jnp.roll(xx, -1, axis=-1) - jnp.roll(xx, 1, axis=-1)
        return jnp.stack([rh, rw], axis=-3)

    # --- doublecentral (default), flattened-path shape ---
    y = jax.block_until_ready(grad_operators_forward(x, direction=1))
    assert y.shape == (2, 4, 2, 16, 16), y.shape
    ref = ref_grad(x)
    if not bool(jnp.allclose(y, ref, atol=1e-5, rtol=1e-5)):
        raise AssertionError("doublecentral output does not match reference")

    # --- central mode (scaled stencil) ---
    yc = jax.block_until_ready(grad_operators_forward(x, direction=1, mode="central"))
    if not bool(jnp.allclose(yc, 0.5 * ref, atol=1e-5, rtol=1e-5)):
        raise AssertionError("central output does not match reference")

    # --- forward mode (asymmetric stencil, exercises the k1 term) ---
    yf = jax.block_until_ready(grad_operators_forward(x, direction=1, mode="forward"))
    ref_f = jnp.stack([jnp.roll(x, -1, axis=-2) - x, jnp.roll(x, -1, axis=-1) - x], axis=-3)
    if not bool(jnp.allclose(yf, ref_f, atol=1e-5, rtol=1e-5)):
        raise AssertionError("forward-mode output does not match reference")

    # --- aligned shape: exercises the 3-D (H%8==0, W%128==0) fast path ---
    x2 = jax.random.normal(jax.random.PRNGKey(2), (2, 8, 128), dtype=jnp.float32)
    y2 = jax.block_until_ready(grad_operators_forward(x2, direction=1))
    assert y2.shape == (2, 2, 8, 128), y2.shape
    if not bool(jnp.allclose(y2, ref_grad(x2), atol=1e-5, rtol=1e-5)):
        raise AssertionError("3-D fast-path output does not match reference")

    # --- complex input (real/imag through one pallas_call, no stacked copy) ---
    xi = jax.random.normal(jax.random.PRNGKey(1), (2, 4, 16, 16), dtype=jnp.float32)
    xc = jax.lax.complex(x, xi)
    yz = jax.block_until_ready(grad_operators_forward(xc, direction=1))
    if not bool(jnp.allclose(yz, jax.lax.complex(ref, ref_grad(xi)), atol=1e-5, rtol=1e-5)):
        raise AssertionError("complex output does not match reference")

    # --- bf16 input (dtype-aware tiling; bf16 in-kernel math on v6e/v7x) ---
    xb = jax.random.normal(jax.random.PRNGKey(3), (2, 4, 16, 16), dtype=jnp.bfloat16)
    yb = jax.block_until_ready(grad_operators_forward(xb, direction=1))
    ref_b = ref_grad(xb.astype(jnp.float32))
    if not bool(jnp.allclose(yb.astype(jnp.float32), ref_b, atol=5e-2, rtol=5e-2)):
        raise AssertionError("bf16 output does not match reference")

    print("KERNEL_OK")
</pallas_src>

<mosaic_0001>
module attributes {stable_mosaic.version = 11 : i64} {
  func.func @kernel(%arg0: i32, %arg1: memref<8x256xf32, #tpu.memory_space<vmem>>, %arg2: memref<8x512xf32, #tpu.memory_space<vmem>>) attributes {dimension_semantics = [#tpu.dimension_semantics<parallel>], iteration_bounds = array<i64: 1>, scalar_prefetch = 0 : i64, scratch_operands = 0 : i64, tpu.core_type = #tpu.core_type<tc>, window_params = [{transform_indices = @transform_0, window_bounds = array<i64: 8, 256>}, {transform_indices = @transform_1, window_bounds = array<i64: 8, 512>}]} {
    %c0 = arith.constant 0 : index
    %c0_0 = arith.constant 0 : index
    %0 = vector.load %arg1[%c0, %c0_0] : memref<8x256xf32, #tpu.memory_space<vmem>>, vector<8x256xf32>
    %c240_i32 = arith.constant 240 : i32
    %1 = tpu.dynamic_rotate %0 by %c240_i32 dim 1 : vector<8x256xf32>, i32 -> vector<8x256xf32>
    %c16_i32 = arith.constant 16 : i32
    %2 = tpu.dynamic_rotate %0 by %c16_i32 dim 1 : vector<8x256xf32>, i32 -> vector<8x256xf32>
    %3 = arith.subf %1, %2 : vector<8x256xf32>
    %c0_1 = arith.constant 0 : index
    %c0_2 = arith.constant 0 : index
    %4 = vector.load %arg2[%c0_1, %c0_2] : memref<8x512xf32, #tpu.memory_space<vmem>>, vector<8x256xf32>
    tpu.vector_store %arg2[%c0_1, %c0_2], %3 {strides = array<i32>} : memref<8x512xf32, #tpu.memory_space<vmem>>, vector<8x256xf32>,
    %5 = tpu.iota {dimensions = array<i32: 1>} : vector<1x256xi32>
    %c16_i32_3 = arith.constant 16 : i32
    %c0_i32 = arith.constant 0 : i32
    %6 = arith.cmpi eq, %c16_i32_3, %c0_i32 : i32
    %c1_i32 = arith.constant 1 : i32
    %7 = arith.select %6, %c1_i32, %c16_i32_3 : i32
    %8 = vector.broadcast %7 : i32 to vector<1x256xi32>
    %9 = arith.remsi %5, %8 : vector<1x256xi32>
    %c0_i32_4 = arith.constant 0 : i32
    %10 = vector.broadcast %c0_i32_4 : i32 to vector<1x256xi32>
    %11 = arith.cmpi ne, %9, %10 : vector<1x256xi32>
    %c0_i32_5 = arith.constant 0 : i32
    %12 = vector.broadcast %c0_i32_5 : i32 to vector<1x256xi32>
    %13 = arith.cmpi slt, %9, %12 : vector<1x256xi32>
    %c0_i32_6 = arith.constant 0 : i32
    %14 = arith.cmpi slt, %7, %c0_i32_6 : i32
    %15 = vector.broadcast %14 : i1 to vector<1x256xi1>
    %16 = vector.broadcast %15 : vector<1x256xi1> to vector<1x256xi1>
    %17 = arith.xori %13, %16 : vector<1x256xi1>
    %18 = arith.andi %17, %11 : vector<1x256xi1>
    %19 = vector.broadcast %7 : i32 to vector<1x256xi32>
    %20 = arith.addi %9, %19 : vector<1x256xi32>
    %21 = arith.select %18, %20, %9 : vector<1x256xi1>, vector<1x256xi32>
    %c15_i32 = arith.constant 15 : i32
    %22 = vector.broadcast %c15_i32 : i32 to vector<1x256xi32>
    %23 = arith.cmpi eq, %21, %22 : vector<1x256xi32>
    %c15_i32_7 = arith.constant 15 : i32
    %24 = tpu.dynamic_rotate %0 by %c15_i32_7 dim 1 : vector<8x256xf32>, i32 -> vector<8x256xf32>
    %c255_i32 = arith.constant 255 : i32
    %25 = tpu.dynamic_rotate %0 by %c255_i32 dim 1 : vector<8x256xf32>, i32 -> vector<8x256xf32>
    %26 = vector.shape_cast %23 : vector<1x256xi1> to vector<1x256xi1>
    %27 = vector.broadcast %26 : vector<1x256xi1> to vector<8x256xi1>
    %28 = arith.select %27, %24, %25 : vector<8x256xi1>, vector<8x256xf32>
    %c0_i32_8 = arith.constant 0 : i32
    %29 = vector.broadcast %c0_i32_8 : i32 to vector<1x256xi32>
    %30 = arith.cmpi eq, %21, %29 : vector<1x256xi32>
    %c241_i32 = arith.constant 241 : i32
    %31 = tpu.dynamic_rotate %0 by %c241_i32 dim 1 : vector<8x256xf32>, i32 -> vector<8x256xf32>
    %c1_i32_9 = arith.constant 1 : i32
    %32 = tpu.dynamic_rotate %0 by %c1_i32_9 dim 1 : vector<8x256xf32>, i32 -> vector<8x256xf32>
    %33 = vector.shape_cast %30 : vector<1x256xi1> to vector<1x256xi1>
    %34 = vector.broadcast %33 : vector<1x256xi1> to vector<8x256xi1>
    %35 = arith.select %34, %31, %32 : vector<8x256xi1>, vector<8x256xf32>
    %36 = arith.subf %28, %35 : vector<8x256xf32>
    %c0_10 = arith.constant 0 : index
    %c256 = arith.constant 256 : index
    %37 = vector.load %arg2[%c0_10, %c256] : memref<8x512xf32, #tpu.memory_space<vmem>>, vector<8x256xf32>
    tpu.vector_store %arg2[%c0_10, %c256], %36 {strides = array<i32>} : memref<8x512xf32, #tpu.memory_space<vmem>>, vector<8x256xf32>,
    return
  }
  func.func @transform_0(%arg0: i32) -> (i32, i32) {
    %c0_i32 = arith.constant 0 : i32
    %c0_i32_0 = arith.constant 0 : i32
    return %arg0, %c0_i32 : i32, i32
  }
  func.func @transform_1(%arg0: i32) -> (i32, i32) {
    %c0_i32 = arith.constant 0 : i32
    %c0_i32_0 = arith.constant 0 : i32
    return %arg0, %c0_i32 : i32, i32
  }
}

</mosaic_0001>

<llo_original>
// kernel: tpu_custom_call.1
$region0: #{tpu_custom_call.1}
  #allocation0 [shape = 'u32[]', space=smem, size = 0x4, offset = 0x4, fixed_abs, tag = 'smem constant byte address 0x4 - core index']
  #allocation1 [shape = 'u32[72,128]{1,0:T(1,128)}', space=vmem, size = 0x9000, scoped, tag = 'internal scratch']
  %s0 = inlined_call_operand.hbm [shape: f32[8,256], index: 0, kind: input, shape index: {}]
  %s1 = inlined_call_operand.hbm [shape: f32[8,512], index: 1, kind: output, shape index: {}]
  %s2 = sld [smem:[#allocation0]]
  $region18: #{tpu_custom_call.1} parent=0
    _
  %s4 = ssub.s32 1, %s2
  %s5 = scalar_select 0, %s4, %s2
  $region1: #{tpu_custom_call.1} parent=0
    #allocation2 [shape = 'u8[8192]{0}', space=vmem, size = 0x2000, scoped, tag = 'input window, operand 0, single buffered']
    #allocation3 [shape = 's32[1]{0}', space=sflag, size = 0x4, scoped, tag = 'scoped memory for tpu_custom_call.1']
    #allocation4 [shape = 's32[1]{0}', space=sflag, size = 0x4, scoped, tag = 'scoped memory for tpu_custom_call.1']
    #allocation5 [shape = 'u8[16384]{0}', space=vmem, size = 0x4000, scoped, tag = 'output window, operand 0, single buffered']
    %6 = vsyncpa [#allocation3], 0
    %7 = vsyncpa [#allocation4], 0
    // Predicated region
    $region2: #{tpu_custom_call.1} parent=1 // pred_check
      _
    $region3: #{tpu_custom_call.1} parent=1 // pred_check_branch
      %9 = sbr.rel (0) target = $region5
    $region4: #{tpu_custom_call.1} parent=1 // pred_region
      %11 = vsyncadd [#allocation3], 0
      %s13 = sshll.u32 %s0, 4
      %s14 = int_to_ptr.hbm [resolvable:$true] %s13
      %s15 = sshll.u32 [#allocation2], 4
      %s16 = int_to_ptr.vmem [resolvable:$true] %s15
      %18 = dma.hbm_to_vmem [thread:$0]  %s14, 256, %s16, [#allocation3]
    $region5: #{tpu_custom_call.1} parent=1 // pred_fallthru
      _
    // Predicated region
    $region6: #{tpu_custom_call.1} parent=1 // pred_check
      _
    $region7: #{tpu_custom_call.1} parent=1 // pred_check_branch
      %20 = sbr.rel (0) target = $region9
    $region8: #{tpu_custom_call.1} parent=1 // pred_region
      %22 = dma.done [#allocation3], 256
    $region9: #{tpu_custom_call.1} parent=1 // pred_fallthru
      _
    %v23 = vld [vmem:[#allocation2] sm:$0xff]
    %v24 = vld [vmem:[#allocation2 + $0x8] sm:$0xff]
    %25 = vrot.lane.b32.xlu0 %v23, 112
    %v26 = vpop.permute.xlu0 %25
    %27 = vrot.lane.b32.xlu0 %v24, 112
    %v28 = vpop.permute.xlu0 %27
    %v29 = vlaneseq
    %v30 = vand.u32 %v29, 127
    %vm31 = vcmp.lt.s32.totalorder %v30, 112
    %v32 = vsel %vm31, %v26, %v28
    %v33 = vsel %vm31, %v28, %v26
    %34 = vrot.lane.b32.xlu0 %v23, 16
    %v35 = vpop.permute.xlu0 %34
    %36 = vrot.lane.b32.xlu0 %v24, 16
    %v37 = vpop.permute.xlu0 %36
    %vm38 = vcmp.lt.s32.totalorder %v30, 16
    %v39 = vsel %vm38, %v35, %v37
    %v40 = vsel %vm38, %v37, %v35
    %v41 = vsub.f32 %v32, %v40
    %v42 = vsub.f32 %v33, %v39
    %43 = vst [vmem:[#allocation5] sm:$0xff] %v41
    %44 = vst [vmem:[#allocation5 + $0x8] sm:$0xff] %v42
    %v45 = vadd.s32 %v30, 128
    %vm46 = vcmp.lt.s32.totalorder %v30, 0
    %v47 = vsub.s32 0, %v30
    %v48 = vsel %vm46, %v47, %v30
    %v49 = vshrl.u32 %v48, 4
    %v50 = vand.u32 %v48, 15
    %v51 = vsub.s32 0, %v50
    %v52 = vsel %vm46, %v51, %v50
    %vm53 = vcmp.lt.s32.totalorder %v45, 0
    %v54 = vsub.s32 0, %v45
    %v55 = vsel %vm53, %v54, %v45
    %v56 = vshrl.u32 %v55, 4
    %v57 = vand.u32 %v55, 15
    %v58 = vsub.s32 0, %v57
    %v59 = vsel %vm53, %v58, %v57
    %vm60 = vcmp.ne.s32.totalorder %v52, 0
    %vm61 = vcmp.ne.s32.totalorder %v59, 0
    %vm62 = vcmp.lt.s32.totalorder %v52, 0
    %vm63 = vcmp.lt.s32.totalorder %v59, 0
    %vm64 = vmand %vm62, %vm60
    %vm65 = vmand %vm63, %vm61
    %v66 = vadd.s32 %v52, 16
    %v67 = vadd.s32 %v59, 16
    %v68 = vsel %vm64, %v66, %v52
    %v69 = vsel %vm65, %v67, %v59
    %vm70 = vcmp.eq.s32.totalorder %v68, 15
    %vm71 = vcmp.eq.s32.totalorder %v69, 15
    %72 = vrot.lane.b32.xlu0 %v23, 15
    %v73 = vpop.permute.xlu0 %72
    %74 = vrot.lane.b32.xlu0 %v24, 15
    %v75 = vpop.permute.xlu0 %74
    %vm76 = vcmp.lt.s32.totalorder %v30, 15
    %v77 = vsel %vm76, %v73, %v75
    %v78 = vsel %vm76, %v75, %v73
    %79 = vrot.lane.b32.xlu0 %v23, 127
    %v80 = vpop.permute.xlu0 %79
    %81 = vrot.lane.b32.xlu0 %v24, 127
    %v82 = vpop.permute.xlu0 %81
    %vm83 = vcmp.lt.s32.totalorder %v30, 127
    %v84 = vsel %vm83, %v80, %v82
    %v85 = vsel %vm83, %v82, %v80
    %v86 = vsel %vm70, 1, 0
    %v87 = vsel %vm71, 1, 0
    %vm88 = vcmp.eq.s32.totalorder %v86, 1
    %vm89 = vcmp.eq.s32.totalorder %v87, 1
    %v90 = vsel %vm88, %v78, %v84
    %v91 = vsel %vm89, %v77, %v85
    %vm92 = vcmp.eq.s32.totalorder %v68, 0
    %vm93 = vcmp.eq.s32.totalorder %v69, 0
    %94 = vrot.lane.b32.xlu0 %v23, 113
    %v95 = vpop.permute.xlu0 %94
    %96 = vrot.lane.b32.xlu0 %v24, 113
    %v97 = vpop.permute.xlu0 %96
    %vm98 = vcmp.lt.s32.totalorder %v30, 113
    %v99 = vsel %vm98, %v95, %v97
    %v100 = vsel %vm98, %v97, %v95
    %101 = vrot.lane.b32.xlu0 %v23, 1
    %v102 = vpop.permute.xlu0 %101
    %103 = vrot.lane.b32.xlu0 %v24, 1
    %v104 = vpop.permute.xlu0 %103
    %vm105 = vcmp.lt.s32.totalorder %v30, 1
    %v106 = vsel %vm105, %v102, %v104
    %v107 = vsel %vm105, %v104, %v102
    %v108 = vsel %vm92, 1, 0
    %v109 = vsel %vm93, 1, 0
    %vm110 = vcmp.eq.s32.totalorder %v108, 1
    %vm111 = vcmp.eq.s32.totalorder %v109, 1
    %v112 = vsel %vm110, %v99, %v107
    %v113 = vsel %vm111, %v100, %v106
    %v114 = vsub.f32 %v90, %v112
    %v115 = vsub.f32 %v91, %v113
    %116 = vst [vmem:[#allocation5 + $0x10] sm:$0xff] %v114
    %117 = vst [vmem:[#allocation5 + $0x18] sm:$0xff] %v115
    // Predicated region
    $region10: #{tpu_custom_call.1} parent=1 // pred_check
      _
    $region11: #{tpu_custom_call.1} parent=1 // pred_check_branch
      %119 = sbr.rel (0) target = $region13
    $region12: #{tpu_custom_call.1} parent=1 // pred_region
      %121 = vsyncadd [#allocation4], 0
      %s123 = sshll.u32 [#allocation5], 4
      %s124 = int_to_ptr.vmem [resolvable:$true] %s123
      %s125 = sshll.u32 %s1, 4
      %s126 = int_to_ptr.hbm [resolvable:$true] %s125
      %128 = dma.vmem_to_hbm [thread:$0]  %s124, 512, %s126, [#allocation4]
    $region13: #{tpu_custom_call.1} parent=1 // pred_fallthru
      _
    // Predicated region
    $region14: #{tpu_custom_call.1} parent=1 // pred_check
      _
    $region15: #{tpu_custom_call.1} parent=1 // pred_check_branch
      %130 = sbr.rel (0) target = $region17
    $region16: #{tpu_custom_call.1} parent=1 // pred_region
      %132 = dma.done [#allocation4], 512
    $region17: #{tpu_custom_call.1} parent=1 // pred_fallthru
      _
    %133 = vsyncpa [#allocation3], 1
    %134 = vsyncpa [#allocation4], 1

</llo_original>
